<compile_context>
chip_gen: v6e
topology: v6e:2x2x1
jax: 0.10.0
libtpu: 0.0.40
codegen_flags: <defaults>
</compile_context>

<pallas_src>
import jax
import jax.numpy as jnp
from jax import lax
from jax.experimental import pallas as pl
from jax.experimental.pallas import tpu as pltpu


def _round_up(n, m):
    return ((n + m - 1) // m) * m


def encoder_gru_kernel(ids_ref,        # SMEM (T,) int32 token ids (scalar prefetch)
                       emb_proj_ref,   # VMEM (V, 3*Hp) precomputed embedding @ Wx + bx
                       h0_ref,         # VMEM (1, Hp)  initial hidden (lane-padded with 0)
                       wh_ref,         # VMEM (Hp, 3*Hp) fused hidden-side weights
                       bhn_ref,        # VMEM (1, Hp)  b_hn (must stay inside r*(...))
                       out_ref):       # VMEM (T, Hp)  per-step hidden outputs
    Hp = bhn_ref.shape[-1]
    T = out_ref.shape[0]

    def step(t, h):
        tok = ids_ref[t]
        # Input-side gates: a single dynamic-row load of the precomputed
        # projection (embedding @ Wx + [b_ir+b_hr | b_iz+b_hz | b_in]).
        gi = emb_proj_ref[pl.ds(tok, 1), :]                                   # (1, 3*Hp)
        # The only per-step MXU matmul: recurrent projection.
        gh = jnp.dot(h, wh_ref[...], preferred_element_type=jnp.float32)      # (1, 3*Hp)

        # PyTorch GRU cell (gate order r, z, n); slices are 128-lane aligned.
        r = jax.nn.sigmoid(gi[:, 0:Hp] + gh[:, 0:Hp])
        z = jax.nn.sigmoid(gi[:, Hp:2 * Hp] + gh[:, Hp:2 * Hp])
        n = jnp.tanh(gi[:, 2 * Hp:3 * Hp] + r * (gh[:, 2 * Hp:3 * Hp] + bhn_ref[...]))
        h_new = (1.0 - z) * n + z * h                 # padded lanes stay exactly 0

        # TODO(synk): for long sequences, stage 8 rows in an (8, Hp) scratch
        # and flush full-vreg stores instead of a (1, Hp) masked store per step.
        out_ref[pl.ds(t, 1), :] = h_new
        return h_new

    # Strictly serial recurrence; fully unrolled for short static sequences so
    # the LLO scheduler sees the whole chain.
    lax.fori_loop(0, T, step, h0_ref[...], unroll=(T <= 16))


def prepare_kernel_params(params):
    """Fuse/pad the raw per-gate parameters once, outside the kernel."""
    H = params["w_ir"].shape[0]
    Hp = _round_up(H, 128)

    def pad2(a, rows, cols):
        return jnp.pad(a, ((0, rows - a.shape[0]), (0, cols - a.shape[1])))

    wx = jnp.concatenate(
        [pad2(params["w_ir"], H, Hp), pad2(params["w_iz"], H, Hp), pad2(params["w_in"], H, Hp)],
        axis=1)                                                   # (H, 3*Hp)
    wh = jnp.concatenate(
        [pad2(params["w_hr"], Hp, Hp), pad2(params["w_hz"], Hp, Hp), pad2(params["w_hn"], Hp, Hp)],
        axis=1)                                                   # (Hp, 3*Hp)
    bx = jnp.concatenate(
        [pad2(params["b_ir"] + params["b_hr"], 1, Hp),
         pad2(params["b_iz"] + params["b_hz"], 1, Hp),
         pad2(params["b_in"], 1, Hp)],
        axis=1)                                                   # (1, 3*Hp)
    bhn = pad2(params["b_hn"], 1, Hp)                             # (1, Hp)

    # Precompute the whole non-recurrent input-side projection (V, 3*Hp).
    emb = params["embedding"].astype(jnp.float32)
    emb_proj = emb @ wx + bx                                      # (V, 3*Hp); padded cols stay 0

    return {"emb_proj": emb_proj, "wh": wh, "bhn": bhn, "H": H, "Hp": Hp}


def encoder_forward_seq(kparams, token_ids, hidden):
    """Run the encoder GRU over a whole token sequence in ONE pallas_call.
    token_ids: (T,) int32.  hidden: (1, 1, H) f32.
    Returns (outputs (T, 1, H), hidden (1, 1, H)) — identical to applying the
    PyTorch module once per token."""
    H, Hp = kparams["H"], kparams["Hp"]
    T = int(token_ids.shape[0])
    V = kparams["emb_proj"].shape[0]

    h0 = hidden.reshape(1, H).astype(jnp.float32)
    h0p = jnp.pad(h0, ((0, 0), (0, Hp - H)))

    const = lambda i, ids: (0, 0)  # whole-array blocks: DMA'd once, VMEM-resident

    grid_spec = pltpu.PrefetchScalarGridSpec(
        num_scalar_prefetch=1,             # token ids land in SMEM before the kernel runs
        grid=(1,),                         # single grid point; recurrence is an in-kernel loop
        in_specs=[
            pl.BlockSpec((V, 3 * Hp), const),     # precomputed embedding projection
            pl.BlockSpec((1, Hp), const),         # initial hidden
            pl.BlockSpec((Hp, 3 * Hp), const),    # fused hidden-side weights
            pl.BlockSpec((1, Hp), const),         # b_hn
        ],
        out_specs=pl.BlockSpec((T, Hp), const),   # resident; written back once at the end
    )

    out = pl.pallas_call(
        encoder_gru_kernel,
        out_shape=jax.ShapeDtypeStruct((T, Hp), jnp.float32),
        grid_spec=grid_spec,
        compiler_params=pltpu.CompilerParams(
            dimension_semantics=("arbitrary",)),
    )(token_ids.astype(jnp.int32), kparams["emb_proj"], h0p,
      kparams["wh"], kparams["bhn"])

    outputs = out[:, :H]                          # drop lane padding
    new_hidden = outputs[T - 1].reshape(1, 1, H)
    return outputs.reshape(T, 1, H), new_hidden


def encoder_forward(kparams, input_token, hidden):
    """Single-step forward matching EncoderModel.forward exactly.
    input_token: int32 (1,).  hidden: (1, 1, H).  Returns ((1,1,H), (1,1,H))."""
    H = kparams["H"]
    outputs, new_hidden = encoder_forward_seq(kparams, input_token.reshape(1), hidden)
    return outputs.reshape(1, 1, H), new_hidden


def init_params(key, filler_set_size, hidden_dim):
    """Synthetic init mirroring the PyTorch module's parameter shapes.
    Weights are stored as (in_features, out_features), i.e. the transpose of
    PyTorch's (out, in) convention; PyTorch GRU weights would need transpose+split."""
    H = hidden_dim
    stdv = 1.0 / jnp.sqrt(jnp.float32(H))
    keys = jax.random.split(key, 13)

    def u(k, shape):
        return jax.random.uniform(k, shape, jnp.float32, -stdv, stdv)

    return {
        "embedding": jax.random.normal(keys[0], (filler_set_size, H), jnp.float32),
        "w_ir": u(keys[1], (H, H)), "w_iz": u(keys[2], (H, H)), "w_in": u(keys[3], (H, H)),
        "w_hr": u(keys[4], (H, H)), "w_hz": u(keys[5], (H, H)), "w_hn": u(keys[6], (H, H)),
        "b_ir": u(keys[7], (1, H)), "b_iz": u(keys[8], (1, H)), "b_in": u(keys[9], (1, H)),
        "b_hr": u(keys[10], (1, H)), "b_hz": u(keys[11], (1, H)), "b_hn": u(keys[12], (1, H)),
    }


# ----------------------- pure-JAX reference (sanity) -----------------------

def _reference_step(params, tok, h):
    x = params["embedding"][tok].reshape(1, -1)
    gi_r = x @ params["w_ir"] + params["b_ir"]
    gi_z = x @ params["w_iz"] + params["b_iz"]
    gi_n = x @ params["w_in"] + params["b_in"]
    gh_r = h @ params["w_hr"] + params["b_hr"]
    gh_z = h @ params["w_hz"] + params["b_hz"]
    gh_n = h @ params["w_hn"] + params["b_hn"]
    r = jax.nn.sigmoid(gi_r + gh_r)
    z = jax.nn.sigmoid(gi_z + gh_z)
    n = jnp.tanh(gi_n + r * gh_n)
    return (1.0 - z) * n + z * h


def reference_forward(params, input_token, hidden):
    H = hidden.shape[-1]
    h_new = _reference_step(params, input_token[0], hidden.reshape(1, H))
    return h_new.reshape(1, 1, H), h_new.reshape(1, 1, H)


def reference_forward_seq(params, token_ids, hidden):
    H = hidden.shape[-1]
    h = hidden.reshape(1, H)
    outs = []
    for i in range(token_ids.shape[0]):
        h = _reference_step(params, token_ids[i], h)
        outs.append(h)
    return jnp.stack(outs, axis=0), h.reshape(1, 1, H)   # (T, 1, H), (1, 1, H)


if __name__ == "__main__":
    filler_set_size = 16
    hidden_dim = 32

    key = jax.random.PRNGKey(0)
    pkey, hkey, tkey = jax.random.split(key, 3)
    params = init_params(pkey, filler_set_size, hidden_dim)
    kparams = prepare_kernel_params(params)

    # --- single-step call, exact module semantics ---
    input_token = jnp.array([3], dtype=jnp.int32)
    hidden = jax.random.normal(hkey, (1, 1, hidden_dim), jnp.float32)

    output, new_hidden = encoder_forward(kparams, input_token, hidden)
    output = jax.block_until_ready(output)
    new_hidden = jax.block_until_ready(new_hidden)

    ref_out, ref_hid = reference_forward(params, input_token, hidden)
    assert output.shape == (1, 1, hidden_dim)
    assert new_hidden.shape == (1, 1, hidden_dim)
    assert jnp.allclose(output, ref_out, atol=1e-5), "output mismatch vs reference"
    assert jnp.allclose(new_hidden, ref_hid, atol=1e-5), "hidden mismatch vs reference"

    # --- whole sequence fused into one pallas_call + one in-kernel loop ---
    seq_len = 6
    token_ids = jax.random.randint(tkey, (seq_len,), 0, filler_set_size, dtype=jnp.int32)
    seq_out, seq_hid = encoder_forward_seq(kparams, token_ids, hidden)
    seq_out = jax.block_until_ready(seq_out)
    seq_hid = jax.block_until_ready(seq_hid)

    ref_seq_out, ref_seq_hid = reference_forward_seq(params, token_ids, hidden)
    assert seq_out.shape == (seq_len, 1, hidden_dim)
    assert jnp.allclose(seq_out, ref_seq_out, atol=1e-4), "seq output mismatch vs reference"
    assert jnp.allclose(seq_hid, ref_seq_hid, atol=1e-4), "seq hidden mismatch vs reference"

    print("KERNEL_OK")
</pallas_src>

<mosaic_0001>
module attributes {stable_mosaic.version = 11 : i64} {
  func.func @encoder_gru_kernel(%arg0: i32, %arg1: memref<1xi32, #tpu.memory_space<smem>>, %arg2: memref<16x384xf32, #tpu.memory_space<vmem>>, %arg3: memref<1x128xf32, #tpu.memory_space<vmem>>, %arg4: memref<128x384xf32, #tpu.memory_space<vmem>>, %arg5: memref<1x128xf32, #tpu.memory_space<vmem>>, %arg6: memref<1x128xf32, #tpu.memory_space<vmem>>) attributes {dimension_semantics = [#tpu.dimension_semantics<arbitrary>], iteration_bounds = array<i64: 1>, scalar_prefetch = 1 : i64, scratch_operands = 0 : i64, tpu.core_type = #tpu.core_type<tc>, window_params = [{pipeline_mode = #tpu.pipeline_mode<synchronous>, transform_indices = @transform_0, window_bounds = array<i64: 16, 384>}, {pipeline_mode = #tpu.pipeline_mode<synchronous>, transform_indices = @transform_1, window_bounds = array<i64: 1, 128>}, {pipeline_mode = #tpu.pipeline_mode<synchronous>, transform_indices = @transform_2, window_bounds = array<i64: 128, 384>}, {pipeline_mode = #tpu.pipeline_mode<synchronous>, transform_indices = @transform_3, window_bounds = array<i64: 1, 128>}, {pipeline_mode = #tpu.pipeline_mode<synchronous>, transform_indices = @transform_4, window_bounds = array<i64: 1, 128>}]} {
    %c0 = arith.constant 0 : index
    %c0_0 = arith.constant 0 : index
    %0 = vector.load %arg3[%c0, %c0_0] : memref<1x128xf32, #tpu.memory_space<vmem>>, vector<1x128xf32>
    %c0_i32 = arith.constant 0 : i32
    %1 = arith.index_cast %c0_i32 : i32 to index
    %2 = memref.load %arg1[%1] : memref<1xi32, #tpu.memory_space<smem>>
    %3 = arith.index_cast %2 : i32 to index
    %c0_1 = arith.constant 0 : index
    %4 = vector.load %arg2[%3, %c0_1] : memref<16x384xf32, #tpu.memory_space<vmem>>, vector<1x384xf32>
    %c0_2 = arith.constant 0 : index
    %c0_3 = arith.constant 0 : index
    %5 = vector.load %arg4[%c0_2, %c0_3] : memref<128x384xf32, #tpu.memory_space<vmem>>, vector<128x384xf32>
    %cst = arith.constant dense<0.000000e+00> : vector<1x384xf32>
    %6 = tpu.matmul %0, %5, %cst {dimension_numbers = #tpu.dot_dimension_numbers<[1], [0], [0], [1], [0, 0, 1, 1], [], []>} : vector<1x128xf32>, vector<128x384xf32>, vector<1x384xf32> -> vector<1x384xf32>
    %7 = vector.extract_strided_slice %4 {offsets = [0, 0], sizes = [1, 128], strides = [1, 1]} : vector<1x384xf32> to vector<1x128xf32>
    %8 = vector.extract_strided_slice %6 {offsets = [0, 0], sizes = [1, 128], strides = [1, 1]} : vector<1x384xf32> to vector<1x128xf32>
    %9 = arith.addf %7, %8 : vector<1x128xf32>
    %10 = arith.negf %9 : vector<1x128xf32>
    %11 = math.exp %10 : vector<1x128xf32>
    %cst_4 = arith.constant 1.000000e+00 : f32
    %12 = vector.broadcast %cst_4 : f32 to vector<1x128xf32>
    %13 = arith.addf %12, %11 : vector<1x128xf32>
    %14 = arith.divf %12, %13 : vector<1x128xf32>
    %15 = vector.extract_strided_slice %4 {offsets = [0, 128], sizes = [1, 128], strides = [1, 1]} : vector<1x384xf32> to vector<1x128xf32>
    %16 = vector.extract_strided_slice %6 {offsets = [0, 128], sizes = [1, 128], strides = [1, 1]} : vector<1x384xf32> to vector<1x128xf32>
    %17 = arith.addf %15, %16 : vector<1x128xf32>
    %18 = arith.negf %17 : vector<1x128xf32>
    %19 = math.exp %18 : vector<1x128xf32>
    %cst_5 = arith.constant 1.000000e+00 : f32
    %20 = vector.broadcast %cst_5 : f32 to vector<1x128xf32>
    %21 = arith.addf %20, %19 : vector<1x128xf32>
    %22 = arith.divf %20, %21 : vector<1x128xf32>
    %23 = vector.extract_strided_slice %4 {offsets = [0, 256], sizes = [1, 128], strides = [1, 1]} : vector<1x384xf32> to vector<1x128xf32>
    %24 = vector.extract_strided_slice %6 {offsets = [0, 256], sizes = [1, 128], strides = [1, 1]} : vector<1x384xf32> to vector<1x128xf32>
    %c0_6 = arith.constant 0 : index
    %c0_7 = arith.constant 0 : index
    %25 = vector.load %arg5[%c0_6, %c0_7] : memref<1x128xf32, #tpu.memory_space<vmem>>, vector<1x128xf32>
    %26 = arith.addf %24, %25 : vector<1x128xf32>
    %27 = arith.mulf %14, %26 : vector<1x128xf32>
    %28 = arith.addf %23, %27 : vector<1x128xf32>
    %29 = math.tanh %28 : vector<1x128xf32>
    %cst_8 = arith.constant 1.000000e+00 : f32
    %30 = vector.broadcast %cst_8 : f32 to vector<1x128xf32>
    %31 = arith.subf %30, %22 : vector<1x128xf32>
    %32 = arith.mulf %31, %29 : vector<1x128xf32>
    %33 = arith.mulf %22, %0 : vector<1x128xf32>
    %34 = arith.addf %32, %33 : vector<1x128xf32>
    %35 = arith.index_cast %c0_i32 : i32 to index
    %c0_9 = arith.constant 0 : index
    %36 = vector.load %arg6[%35, %c0_9] : memref<1x128xf32, #tpu.memory_space<vmem>>, vector<1x128xf32>
    tpu.vector_store %arg6[%35, %c0_9], %34 {strides = array<i32>} : memref<1x128xf32, #tpu.memory_space<vmem>>, vector<1x128xf32>,
    %c1_i32 = arith.constant 1 : i32
    return
  }
  func.func @transform_0(%arg0: i32, %arg1: memref<1xi32, #tpu.memory_space<smem>>) -> (i32, i32) {
    %c0_i32 = arith.constant 0 : i32
    %c0_i32_0 = arith.constant 0 : i32
    %c0_i32_1 = arith.constant 0 : i32
    return %c0_i32, %c0_i32_0 : i32, i32
  }
  func.func @transform_1(%arg0: i32, %arg1: memref<1xi32, #tpu.memory_space<smem>>) -> (i32, i32) {
    %c0_i32 = arith.constant 0 : i32
    %c0_i32_0 = arith.constant 0 : i32
    %c0_i32_1 = arith.constant 0 : i32
    return %c0_i32, %c0_i32_0 : i32, i32
  }
  func.func @transform_2(%arg0: i32, %arg1: memref<1xi32, #tpu.memory_space<smem>>) -> (i32, i32) {
    %c0_i32 = arith.constant 0 : i32
    %c0_i32_0 = arith.constant 0 : i32
    %c0_i32_1 = arith.constant 0 : i32
    return %c0_i32, %c0_i32_0 : i32, i32
  }
  func.func @transform_3(%arg0: i32, %arg1: memref<1xi32, #tpu.memory_space<smem>>) -> (i32, i32) {
    %c0_i32 = arith.constant 0 : i32
    %c0_i32_0 = arith.constant 0 : i32
    %c0_i32_1 = arith.constant 0 : i32
    return %c0_i32, %c0_i32_0 : i32, i32
  }
  func.func @transform_4(%arg0: i32, %arg1: memref<1xi32, #tpu.memory_space<smem>>) -> (i32, i32) {
    %c0_i32 = arith.constant 0 : i32
    %c0_i32_0 = arith.constant 0 : i32
    %c0_i32_1 = arith.constant 0 : i32
    return %c0_i32, %c0_i32_0 : i32, i32
  }
}

</mosaic_0001>

<llo_original>
// kernel: tpu_custom_call.1
$region0: #{tpu_custom_call.1}
  #allocation0 [shape = 'u32[]', space=smem, size = 0x4, offset = 0x4, fixed_abs, tag = 'smem constant byte address 0x4 - core index']
  #allocation1 [shape = 'u32[144,128]{1,0:T(1,128)}', space=vmem, size = 0x12000, scoped, tag = 'internal scratch']
  #allocation2 [shape = 's32[1]{0}', space=sflag, size = 0x4, scoped, tag = 'scoped memory for tpu_custom_call.1']
  #allocation3 [shape = 's32[1]{0:T(128)S(6)}', space=smem, size = 0x200, scoped, tag = 'prefetched SMEM operand 0']
  %s0 = inlined_call_operand.<no memory space> [shape: s32[1], index: 0, kind: input, shape index: {}]
  %s1 = inlined_call_operand.hbm [shape: f32[16,384], index: 1, kind: input, shape index: {}]
  %s2 = inlined_call_operand.vmem [shape: f32[1,128], index: 2, kind: input, shape index: {}]
  %s3 = inlined_call_operand.hbm [shape: f32[128,384], index: 3, kind: input, shape index: {}]
  %s4 = inlined_call_operand.vmem [shape: f32[1,128], index: 4, kind: input, shape index: {}]
  %s5 = inlined_call_operand.hbm [shape: f32[1,128], index: 5, kind: output, shape index: {}]
  %s6 = sld [smem:[#allocation0]]
  $region34: #{tpu_custom_call.1} parent=0
    _
  %s8 = ssub.s32 1, %s6
  %s9 = scalar_select 0, %s8, %s6
  %10 = sst [smem:[#allocation3]] %s0
  $region1: #{tpu_custom_call.1} parent=0
    #allocation4 [shape = 'u8[24576]{0}', space=vmem, size = 0x6000, scoped, tag = 'input window, operand 1, single buffered']
    #allocation5 [shape = 's32[1]{0}', space=sflag, size = 0x4, scoped, tag = 'scoped memory for tpu_custom_call.1']
    #allocation6 [shape = 's32[1]{0}', space=sflag, size = 0x4, scoped, tag = 'scoped memory for tpu_custom_call.1']
    #allocation7 [shape = 'u8[196608]{0}', space=vmem, size = 0x30000, scoped, tag = 'input window, operand 3, single buffered']
    #allocation8 [shape = 's32[1]{0}', space=sflag, size = 0x4, scoped, tag = 'scoped memory for tpu_custom_call.1']
    #allocation9 [shape = 'u8[512]{0}', space=vmem, size = 0x400, scoped, tag = 'output window, operand 0, single buffered']
    %11 = vsyncpa [#allocation5], 0
    %12 = vsyncpa [#allocation8], 0
    %13 = vsyncpa [#allocation6], 0
    // Predicated region
    $region2: #{tpu_custom_call.1} parent=1 // pred_check
      _
    $region3: #{tpu_custom_call.1} parent=1 // pred_check_branch
      %15 = sbr.rel (0) target = $region5
    $region4: #{tpu_custom_call.1} parent=1 // pred_region
      %s17 = ssub.s32 768, 768
      %18 = vsyncadd [#allocation5], %s17
      %s19 = sshll.u32 [#allocation4], 4
      %s20 = int_to_ptr.vmem [resolvable:$true] %s19
      %25 = dma.hbm_to_vmem [thread:$0]  %s1, 768, %s20, [#allocation5], 384, 384, 24
    $region5: #{tpu_custom_call.1} parent=1 // pred_fallthru
      _
    // Predicated region
    $region6: #{tpu_custom_call.1} parent=1 // pred_check
      _
    $region7: #{tpu_custom_call.1} parent=1 // pred_check_branch
      %27 = sbr.rel (0) target = $region9
    $region8: #{tpu_custom_call.1} parent=1 // pred_region
      _
    $region9: #{tpu_custom_call.1} parent=1 // pred_fallthru
      _
    // Predicated region
    $region10: #{tpu_custom_call.1} parent=1 // pred_check
      _
    $region11: #{tpu_custom_call.1} parent=1 // pred_check_branch
      %29 = sbr.rel (0) target = $region13
    $region12: #{tpu_custom_call.1} parent=1 // pred_region
      %s31 = ssub.s32 6144, 6144
      %32 = vsyncadd [#allocation8], %s31
      %s33 = sshll.u32 [#allocation7], 4
      %s34 = int_to_ptr.vmem [resolvable:$true] %s33
      %39 = dma.hbm_to_vmem [thread:$0]  %s3, 6144, %s34, [#allocation8], 384, 384, 24
    $region13: #{tpu_custom_call.1} parent=1 // pred_fallthru
      _
    // Predicated region
    $region14: #{tpu_custom_call.1} parent=1 // pred_check
      _
    $region15: #{tpu_custom_call.1} parent=1 // pred_check_branch
      %41 = sbr.rel (0) target = $region17
    $region16: #{tpu_custom_call.1} parent=1 // pred_region
      _
    $region17: #{tpu_custom_call.1} parent=1 // pred_fallthru
      _
    // Predicated region
    $region18: #{tpu_custom_call.1} parent=1 // pred_check
      _
    $region19: #{tpu_custom_call.1} parent=1 // pred_check_branch
      %43 = sbr.rel (0) target = $region21
    $region20: #{tpu_custom_call.1} parent=1 // pred_region
      %44 = dma.done [#allocation5], 768
    $region21: #{tpu_custom_call.1} parent=1 // pred_fallthru
      _
    // Predicated region
    $region22: #{tpu_custom_call.1} parent=1 // pred_check
      _
    $region23: #{tpu_custom_call.1} parent=1 // pred_check_branch
      %46 = sbr.rel (0) target = $region25
    $region24: #{tpu_custom_call.1} parent=1 // pred_region
      %47 = dma.done [#allocation8], 6144
    $region25: #{tpu_custom_call.1} parent=1 // pred_fallthru
      _
    %v48 = vld [vmem:[%s2] sm:$0x1]
    %s49 = sld [smem:[#allocation3]]
    %s50 = sshra.s32 %s49, 3
    %s51 = sand.u32 %s49, 7
    %s52 = sshra.s32 %s49, 3
    %s53 = sand.u32 %s49, 7
    %s54 = smul.u32 %s50, 3
    %s55 = smul.u32 %s54, 8
    %s56 = sadd.s32 %s55, %s53
    %s57 = scalar_lea.vmem [#allocation4], %s56
    %v58 = vld [vmem:[%s57] ss:$8 sm:$0x7]
    %v59 = vld [vmem:[#allocation7] sm:$0xff]
    %v60 = vld [vmem:[#allocation7 + $0x8] sm:$0xff]
    %v61 = vld [vmem:[#allocation7 + $0x10] sm:$0xff]
    %v62 = vld [vmem:[#allocation7 + $0x18] sm:$0xff]
    %v63 = vld [vmem:[#allocation7 + $0x20] sm:$0xff]
    %v64 = vld [vmem:[#allocation7 + $0x28] sm:$0xff]
    %v65 = vld [vmem:[#allocation7 + $0x30] sm:$0xff]
    %v66 = vld [vmem:[#allocation7 + $0x38] sm:$0xff]
    %v67 = vld [vmem:[#allocation7 + $0x40] sm:$0xff]
    %v68 = vld [vmem:[#allocation7 + $0x48] sm:$0xff]
    %v69 = vld [vmem:[#allocation7 + $0x50] sm:$0xff]
    %v70 = vld [vmem:[#allocation7 + $0x58] sm:$0xff]
    %v71 = vld [vmem:[#allocation7 + $0x60] sm:$0xff]
    %v72 = vld [vmem:[#allocation7 + $0x68] sm:$0xff]
    %v73 = vld [vmem:[#allocation7 + $0x70] sm:$0xff]
    %v74 = vld [vmem:[#allocation7 + $0x78] sm:$0xff]
    %v75 = vld [vmem:[#allocation7 + $0x80] sm:$0xff]
    %v76 = vld [vmem:[#allocation7 + $0x88] sm:$0xff]
    %v77 = vld [vmem:[#allocation7 + $0x90] sm:$0xff]
    %v78 = vld [vmem:[#allocation7 + $0x98] sm:$0xff]
    %v79 = vld [vmem:[#allocation7 + $0xa0] sm:$0xff]
    %v80 = vld [vmem:[#allocation7 + $0xa8] sm:$0xff]
    %v81 = vld [vmem:[#allocation7 + $0xb0] sm:$0xff]
    %v82 = vld [vmem:[#allocation7 + $0xb8] sm:$0xff]
    %v83 = vld [vmem:[#allocation7 + $0xc0] sm:$0xff]
    %v84 = vld [vmem:[#allocation7 + $0xc8] sm:$0xff]
    %v85 = vld [vmem:[#allocation7 + $0xd0] sm:$0xff]
    %v86 = vld [vmem:[#allocation7 + $0xd8] sm:$0xff]
    %v87 = vld [vmem:[#allocation7 + $0xe0] sm:$0xff]
    %v88 = vld [vmem:[#allocation7 + $0xe8] sm:$0xff]
    %v89 = vld [vmem:[#allocation7 + $0xf0] sm:$0xff]
    %v90 = vld [vmem:[#allocation7 + $0xf8] sm:$0xff]
    %v91 = vld [vmem:[#allocation7 + $0x100] sm:$0xff]
    %v92 = vld [vmem:[#allocation7 + $0x108] sm:$0xff]
    %v93 = vld [vmem:[#allocation7 + $0x110] sm:$0xff]
    %v94 = vld [vmem:[#allocation7 + $0x118] sm:$0xff]
    %v95 = vld [vmem:[#allocation7 + $0x120] sm:$0xff]
    %v96 = vld [vmem:[#allocation7 + $0x128] sm:$0xff]
    %v97 = vld [vmem:[#allocation7 + $0x130] sm:$0xff]
    %v98 = vld [vmem:[#allocation7 + $0x138] sm:$0xff]
    %v99 = vld [vmem:[#allocation7 + $0x140] sm:$0xff]
    %v100 = vld [vmem:[#allocation7 + $0x148] sm:$0xff]
    %v101 = vld [vmem:[#allocation7 + $0x150] sm:$0xff]
    %v102 = vld [vmem:[#allocation7 + $0x158] sm:$0xff]
    %v103 = vld [vmem:[#allocation7 + $0x160] sm:$0xff]
    %v104 = vld [vmem:[#allocation7 + $0x168] sm:$0xff]
    %v105 = vld [vmem:[#allocation7 + $0x170] sm:$0xff]
    %v106 = vld [vmem:[#allocation7 + $0x178] sm:$0xff]
    %107 = vmatprep.subr.mxu0 %v105
    %108 = vmatpush1.msra.mxu0 %v104
    %109 = vmatprep.subr.mxu0 %v102
    %110 = vmatpush1.msra.mxu0 %v101
    %111 = vmatprep.subr.mxu0 %v99
    %112 = vmatpush1.msra.mxu0 %v98
    %113 = vmatprep.subr.mxu0 %v96
    %114 = vmatpush1.msra.mxu0 %v95
    %115 = vmatprep.subr.mxu0 %v93
    %116 = vmatpush1.msra.mxu0 %v92
    %117 = vmatprep.subr.mxu0 %v90
    %118 = vmatpush1.msra.mxu0 %v89
    %119 = vmatprep.subr.mxu0 %v87
    %120 = vmatpush1.msra.mxu0 %v86
    %121 = vmatprep.subr.mxu0 %v84
    %122 = vmatpush1.msra.mxu0 %v83
    %123 = vmatprep.subr.mxu0 %v81
    %124 = vmatpush1.msra.mxu0 %v80
    %125 = vmatprep.subr.mxu0 %v78
    %126 = vmatpush1.msra.mxu0 %v77
    %127 = vmatprep.subr.mxu0 %v75
    %128 = vmatpush1.msra.mxu0 %v74
    %129 = vmatprep.subr.mxu0 %v72
    %130 = vmatpush1.msra.mxu0 %v71
    %131 = vmatprep.subr.mxu0 %v69
    %132 = vmatpush1.msra.mxu0 %v68
    %133 = vmatprep.subr.mxu0 %v66
    %134 = vmatpush1.msra.mxu0 %v65
    %135 = vmatprep.subr.mxu0 %v63
    %136 = vmatpush1.msra.mxu0 %v62
    %137 = vmatprep.subr.mxu0 %v60
    %138 = vmatpush1.msra.mxu0 %v59
    %139 = vmatprep.subr.mxu0 0.0
    %140 = vmatpush2.msra.mxu0 0.0
    %141 = vmatprep.subr.mxu0 0.0
    %142 = vmatpush2.msra.mxu0 0.0
    %143 = vmatprep.subr.mxu0 0.0
    %144 = vmatpush2.msra.mxu0 0.0
    %145 = vmatprep.subr.mxu0 0.0
    %146 = vmatpush2.msra.mxu0 0.0
    %147 = vmatprep.subr.mxu0 0.0
    %148 = vmatpush2.msra.mxu0 0.0
    %149 = vmatprep.subr.mxu0 0.0
    %150 = vmatpush2.msra.mxu0 0.0
    %151 = vmatprep.subr.mxu0 0.0
    %152 = vmatpush2.msra.mxu0 0.0
    %153 = vmatprep.subr.mxu0 0.0
    %154 = vmatpush2.msra.mxu0 0.0
    %155 = vmatprep.subr.mxu0 0.0
    %156 = vmatpush2.msra.mxu0 0.0
    %157 = vmatprep.subr.mxu0 0.0
    %158 = vmatpush2.msra.mxu0 0.0
    %159 = vmatprep.subr.mxu0 0.0
    %160 = vmatpush2.msra.mxu0 0.0
    %161 = vmatprep.subr.mxu0 0.0
    %162 = vmatpush2.msra.mxu0 0.0
    %163 = vmatprep.subr.mxu0 0.0
    %164 = vmatpush2.msra.mxu0 0.0
    %165 = vmatprep.subr.mxu0 0.0
    %166 = vmatpush2.msra.mxu0 0.0
    %167 = vmatprep.subr.mxu0 0.0
    %168 = vmatpush2.msra.mxu0 0.0
    %169 = vmatprep.subr.mxu0 0.0
    %170 = vmatpush2.msra.mxu0 0.0
    %171 = vmatprep.mubr.f32.mxu0 0.0
    %172 = vmatmul.mubr.f32.gmra.mxu0 %v48
    %v173 = vpop.f32.mrf.mxu0
    %v174 = vadd.f32 0.0, %v173
    %v175 = vpop.f32.mrf.mxu0
    %v176 = vadd.f32 0.0, %v175
    %177 = vdwg.mxu0
    %178 = vmatprep.subr.mxu0 0.0
    %179 = vmatpush1.msra.mxu0 %v106
    %180 = vmatprep.subr.mxu0 0.0
    %181 = vmatpush1.msra.mxu0 %v103
    %182 = vmatprep.subr.mxu0 0.0
    %183 = vmatpush1.msra.mxu0 %v100
    %184 = vmatprep.subr.mxu0 0.0
    %185 = vmatpush1.msra.mxu0 %v97
    %186 = vmatprep.subr.mxu0 0.0
    %187 = vmatpush1.msra.mxu0 %v94
    %188 = vmatprep.subr.mxu0 0.0
    %189 = vmatpush1.msra.mxu0 %v91
    %190 = vmatprep.subr.mxu0 0.0
    %191 = vmatpush1.msra.mxu0 %v88
    %192 = vmatprep.subr.mxu0 0.0
    %193 = vmatpush1.msra.mxu0 %v85
    %194 = vmatprep.subr.mxu0 0.0
    %195 = vmatpush1.msra.mxu0 %v82
    %196 = vmatprep.subr.mxu0 0.0
    %197 = vmatpush1.msra.mxu0 %v79
    %198 = vmatprep.subr.mxu0 0.0
    %199 = vmatpush1.msra.mxu0 %v76
    %200 = vmatprep.subr.mxu0 0.0
    %201 = vmatpush1.msra.mxu0 %v73
    %202 = vmatprep.subr.mxu0 0.0
    %203 = vmatpush1.msra.mxu0 %v70
    %204 = vmatprep.subr.mxu0 0.0
    %205 = vmatpush1.msra.mxu0 %v67
    %206 = vmatprep.subr.mxu0 0.0
    %207 = vmatpush1.msra.mxu0 %v64
    %208 = vmatprep.subr.mxu0 0.0
    %209 = vmatpush1.msra.mxu0 %v61
    %210 = vmatprep.subr.mxu0 0.0
    %211 = vmatpush2.msra.mxu0 0.0
    %212 = vmatprep.subr.mxu0 0.0
    %213 = vmatpush2.msra.mxu0 0.0
    %214 = vmatprep.subr.mxu0 0.0
    %215 = vmatpush2.msra.mxu0 0.0
    %216 = vmatprep.subr.mxu0 0.0
    %217 = vmatpush2.msra.mxu0 0.0
    %218 = vmatprep.subr.mxu0 0.0
    %219 = vmatpush2.msra.mxu0 0.0
    %220 = vmatprep.subr.mxu0 0.0
    %221 = vmatpush2.msra.mxu0 0.0
    %222 = vmatprep.subr.mxu0 0.0
    %223 = vmatpush2.msra.mxu0 0.0
    %224 = vmatprep.subr.mxu0 0.0
    %225 = vmatpush2.msra.mxu0 0.0
    %226 = vmatprep.subr.mxu0 0.0
    %227 = vmatpush2.msra.mxu0 0.0
    %228 = vmatprep.subr.mxu0 0.0
    %229 = vmatpush2.msra.mxu0 0.0
    %230 = vmatprep.subr.mxu0 0.0
    %231 = vmatpush2.msra.mxu0 0.0
    %232 = vmatprep.subr.mxu0 0.0
    %233 = vmatpush2.msra.mxu0 0.0
    %234 = vmatprep.subr.mxu0 0.0
    %235 = vmatpush2.msra.mxu0 0.0
    %236 = vmatprep.subr.mxu0 0.0
    %237 = vmatpush2.msra.mxu0 0.0
    %238 = vmatprep.subr.mxu0 0.0
    %239 = vmatpush2.msra.mxu0 0.0
    %240 = vmatprep.subr.mxu0 0.0
    %241 = vmatpush2.msra.mxu0 0.0
    %242 = vmatprep.mubr.f32.mxu0 0.0
    %243 = vmatmul.mubr.f32.gmra.mxu0 %v48
    %v244 = vpop.f32.mrf.mxu0
    %v245 = vadd.f32 0.0, %v244
    %v246 = vpop.f32.mrf.mxu0
    %247 = vdwg.mxu0
    %v248 = vadd.f32 %v58, %v174
    %v249 = vxor.u32 %v248, 2147483648
    %v250 = vmul.f32 %v249, 1.442695
    %v251 = vpow.pop %v250
    %v252 = vadd.f32 %v251, 1.0
    %v253 = vrcp.pop %v252
    %v254 = vmul.f32 1.0, %v253
    %v256 = vrot.slane %v58, 1
    %v258 = vadd.f32 %v256, %v176
    %v259 = vxor.u32 %v258, 2147483648
    %v260 = vmul.f32 %v259, 1.442695
    %v261 = vpow.pop %v260
    %v262 = vadd.f32 %v261, 1.0
    %v263 = vrcp.pop %v262
    %v264 = vmul.f32 1.0, %v263
    %v265 = vld [vmem:[%s4] sm:$0x1]
    %v266 = vadd.f32 %v245, %v265
    %v267 = vmul.f32 %v254, %v266
    %v268 = vrot.slane %v58, 2
    %v270 = vadd.f32 %v268, %v267
    %v271 = vtanh.pop %v270
    %v272 = vsub.f32 1.0, %v264
    %v273 = vmul.f32 %v272, %v271
    %v274 = vmul.f32 %v264, %v48
    %v275 = vadd.f32 %v273, %v274
    %276 = vst [vmem:[#allocation9] sm:$0x1] %v275
    // Predicated region
    $region26: #{tpu_custom_call.1} parent=1 // pred_check
      _
    $region27: #{tpu_custom_call.1} parent=1 // pred_check_branch
      %278 = sbr.rel (0) target = $region29
    $region28: #{tpu_custom_call.1} parent=1 // pred_region
      %s280 = ssub.s32 16, 16
      %281 = vsyncadd [#allocation6], %s280
      %s283 = sshll.u32 [#allocation9], 4
      %s284 = int_to_ptr.vmem [resolvable:$true] %s283
      %286 = dma.vmem_to_hbm [thread:$0]  %s284, 16, %s5, [#allocation6]
    $region29: #{tpu_custom_call.1} parent=1 // pred_fallthru
      _
    // Predicated region
    $region30: #{tpu_custom_call.1} parent=1 // pred_check
      _
    $region31: #{tpu_custom_call.1} parent=1 // pred_check_branch
      %288 = sbr.rel (0) target = $region33
    $region32: #{tpu_custom_call.1} parent=1 // pred_region
      %289 = dma.done [#allocation6], 16
    $region33: #{tpu_custom_call.1} parent=1 // pred_fallthru
      _
    %290 = vsyncpa [#allocation5], 1
    %291 = vsyncpa [#allocation8], 1
    %292 = vsyncpa [#allocation6], 1

</llo_original>
